<compile_context>
chip_gen: v5e
topology: v5e:2x2
jax: 0.10.0
libtpu: 0.0.40
codegen_flags: <defaults>
</compile_context>

<pallas_src>
import functools

import jax
import jax.numpy as jnp
from jax import lax
from jax.experimental import pallas as pl
from jax.experimental.pallas import tpu as pltpu

LANE = 128
SUBLANE = 8


def _logdepth_l1_kernel(pred_ref, gt_ref, sum_ref, cnt_ref, *,
                        eps, total_rows, tile_rows, steps, tiles,
                        chunk_rows, unroll, emit_edge):
    p = pl.program_id(0)
    s = pl.program_id(1)
    tile_idx = p * steps + s

    @pl.when(s == 0)
    def _():
        sum_ref[...] = jnp.zeros(sum_ref.shape, sum_ref.dtype)
        cnt_ref[...] = jnp.zeros(cnt_ref.shape, cnt_ref.dtype)

    n_chunks = tile_rows // chunk_rows
    groups = chunk_rows // SUBLANE
    zeros8 = jnp.zeros((SUBLANE, LANE), jnp.float32)

    def load_chunk(g):
        r0 = pl.multiple_of(g * chunk_rows, chunk_rows)
        pred = pred_ref[pl.ds(r0, chunk_rows), :].astype(jnp.float32)
        gt = gt_ref[pl.ds(r0, chunk_rows), :].astype(jnp.float32)
        return pred, gt

    def accumulate(acc, diff, cnt):
        acc_s, acc_c = acc
        # (chunk_rows,128) -> (8,128) with pure VPU adds (no XLU reduction,
        # no per-step read-modify-write of the output block).
        acc_s = acc_s + jnp.sum(diff.reshape(groups, SUBLANE, LANE), axis=0)
        acc_c = acc_c + jnp.sum(cnt.reshape(groups, SUBLANE, LANE), axis=0)
        return acc_s, acc_c

    def fast_body(g, acc):
        pred, gt = load_chunk(g)
        valid = gt > eps
        # log() on masked-out lanes yields NaN/-inf that the select discards;
        # fine for this forward-only kernel and saves one VALU select.
        diff = jnp.where(valid, jnp.abs(jnp.log(gt) - pred), 0.0)
        return accumulate(acc, diff, valid.astype(jnp.float32))

    def run_fast():
        acc_s, acc_c = lax.fori_loop(0, n_chunks, fast_body, (zeros8, zeros8),
                                     unroll=unroll)
        sum_ref[0, :, :] += acc_s
        cnt_ref[0, :, :] += acc_c

    if not emit_edge:
        # Clean case (rows % tile_rows == 0 and no duplicate grid slots):
        # only the mask-free fast path is emitted.
        run_fast()
        return

    # A tile needs the row mask iff it extends past the real rows: the ragged
    # last tile and any index-clamped duplicate slot (tile_idx >= tiles).
    needs_mask = (tile_idx + 1) * tile_rows > total_rows
    is_dup = tile_idx >= tiles

    @pl.when(jnp.logical_not(needs_mask))
    def _():
        run_fast()

    def edge_body(g, acc):
        pred, gt = load_chunk(g)
        row0 = tile_idx * tile_rows + g * chunk_rows
        row_ids = lax.broadcasted_iota(jnp.int32, (chunk_rows, LANE), 0) + row0
        # Row mask discards the unspecified data Pallas reads past the array
        # end in the ragged last block.
        valid = jnp.logical_and(gt > eps, row_ids < total_rows)
        diff = jnp.where(valid, jnp.abs(jnp.log(gt) - pred), 0.0)
        return accumulate(acc, diff, valid.astype(jnp.float32))

    @pl.when(jnp.logical_and(needs_mask, jnp.logical_not(is_dup)))
    def _():
        acc_s, acc_c = lax.fori_loop(0, n_chunks, edge_body, (zeros8, zeros8),
                                     unroll=unroll)
        sum_ref[0, :, :] += acc_s
        cnt_ref[0, :, :] += acc_c
    # Duplicate clamped slots (tile_idx >= tiles) skip compute entirely.


def _tpu_vmem_bytes():
    try:
        return int(pltpu.get_tpu_info().vmem_capacity_bytes)
    except Exception:
        return 64 << 20  # conservative: v7x per-TensorCore VMEM


def _default_tile_rows(itemsize):
    # Biggest block that amortizes the ~0.35us grid-step overhead while still
    # fitting 2 inputs x 2 pipeline buffers: ~8 MiB/input on 128 MiB-VMEM
    # chips (v5e/v6e), ~4 MiB/input on v7x's 64 MiB.
    target_bytes = (8 << 20) if _tpu_vmem_bytes() >= (100 << 20) else (4 << 20)
    return max(1024, target_bytes // (LANE * itemsize))


def _default_num_parallel():
    # The leading "parallel" grid axis only pays on chips with two TensorCores
    # per device (v7x); on single-core v5e/v6e it just risks a wasted
    # duplicate tile of DMA.
    try:
        kind = jax.devices()[0].device_kind.lower()
    except Exception:
        return 1
    return 2 if ("v7" in kind or "tpu7" in kind or "7x" in kind) else 1


def log_depth_l1_loss(pred, gt, eps=1e-05, tile_rows=None, num_parallel=None,
                      chunk_rows=64):
    """Pallas TPU implementation of LogDepthL1Loss.forward."""
    assert pred.shape == gt.shape
    dtype = jnp.promote_types(pred.dtype, gt.dtype)
    if not jnp.issubdtype(dtype, jnp.floating):
        dtype = jnp.float32
    # Keep inputs in their storage dtype: bf16 blocks halve HBM traffic on a
    # bandwidth-bound kernel; the per-chunk f32 cast happens on the VPU.
    pred_f = jnp.ravel(pred).astype(dtype)   # no-op when already `dtype`
    gt_f = jnp.ravel(gt).astype(dtype)
    n = pred_f.shape[0]
    itemsize = jnp.dtype(dtype).itemsize
    # Sublane packing: 8 rows/vreg for 32-bit, 16 for 16-bit dtypes.
    row_align = 8 if itemsize >= 4 else 16
    # TODO(synk): 8-bit inputs would need row_align=32; depth maps are f32/bf16.

    pad_chunk = row_align * LANE
    if n % pad_chunk:
        # Ragged sizes take a one-time pad copy; gt pads with 0 which fails
        # gt > eps, so padded elements contribute nothing.
        pad = pad_chunk - n % pad_chunk
        pred_f = jnp.pad(pred_f, (0, pad))
        gt_f = jnp.pad(gt_f, (0, pad))

    rows = pred_f.shape[0] // LANE
    pred2 = pred_f.reshape(rows, LANE)   # contiguous -> free reshape
    gt2 = gt_f.reshape(rows, LANE)

    if tile_rows is None:
        tile_rows = _default_tile_rows(itemsize)
    if num_parallel is None:
        num_parallel = _default_num_parallel()

    # chunk_rows: per-iteration compute slice (a handful of live vregs).
    chunk_rows = max(row_align, min(int(chunk_rows), rows))
    chunk_rows -= chunk_rows % row_align
    # tile_rows: per-grid-step DMA block; multiple of chunk_rows, <= rows.
    tile_rows = min(max(chunk_rows, int(tile_rows)), rows)
    tile_rows -= tile_rows % chunk_rows

    tiles = pl.cdiv(rows, tile_rows)
    num_parallel = num_parallel if tiles >= num_parallel else 1
    steps = pl.cdiv(tiles, num_parallel)
    emit_edge = (rows % tile_rows != 0) or (tiles % num_parallel != 0)
    n_chunks = tile_rows // chunk_rows
    unroll = max(1, min(8, n_chunks))

    def in_map(p, s):
        # Clamp so grid slots past the real tile count re-read the last tile;
        # the kernel skips their compute (is_dup), so they contribute nothing.
        return (jnp.minimum(p * steps + s, tiles - 1), 0)

    def out_map(p, s):
        return (p, 0, 0)

    kernel = functools.partial(
        _logdepth_l1_kernel, eps=float(eps), total_rows=rows,
        tile_rows=tile_rows, steps=steps, tiles=tiles, chunk_rows=chunk_rows,
        unroll=unroll, emit_edge=emit_edge)

    block_bytes = tile_rows * LANE * itemsize
    # 2 inputs x 2 pipeline buffers + outputs + slack; explicit so large tiles
    # don't silently regress on v7x's 64 MiB VMEM or v5e's 16 MiB default.
    # TODO(synk): add pipeline_mode=pl.Buffered(3) on v7x if traces still show
    # DMA-wait gaps between grid steps.
    vmem_bytes = int(min(64 << 20, max(16 << 20, 6 * block_bytes)))

    sums, cnts = pl.pallas_call(
        kernel,
        out_shape=(
            jax.ShapeDtypeStruct((num_parallel, SUBLANE, LANE), jnp.float32),
            jax.ShapeDtypeStruct((num_parallel, SUBLANE, LANE), jnp.float32),
        ),
        grid_spec=pltpu.PrefetchScalarGridSpec(
            num_scalar_prefetch=0,
            grid=(num_parallel, steps),
            in_specs=[
                pl.BlockSpec((tile_rows, LANE), in_map),
                pl.BlockSpec((tile_rows, LANE), in_map),
            ],
            out_specs=[
                pl.BlockSpec((1, SUBLANE, LANE), out_map),
                pl.BlockSpec((1, SUBLANE, LANE), out_map),
            ],
        ),
        compiler_params=pltpu.CompilerParams(
            dimension_semantics=("parallel", "arbitrary"),
            vmem_limit_bytes=vmem_bytes,
        ),
        cost_estimate=pl.CostEstimate(
            flops=7 * n, transcendentals=n, bytes_accessed=2 * n * itemsize),
    )(pred2, gt2)

    # Single tiny cross-lane reduction + divide outside the hot loop.  NaN when
    # no gt element exceeds eps (matches torch's mean of an empty tensor).
    # Counts/sums accumulate in f32 (exact counts up to 2^24 per lane slot).
    return jnp.sum(sums) / jnp.sum(cnts)


def _reference(pred, gt, eps=1e-05):
    pred = jnp.ravel(pred)
    gt = jnp.ravel(gt)
    mask = gt > eps
    safe_gt = jnp.where(mask, gt, 1.0)
    diff = jnp.where(mask, jnp.abs(jnp.log(safe_gt) - pred), 0.0)
    return jnp.sum(diff) / jnp.sum(mask.astype(jnp.float32))


if __name__ == "__main__":
    key = jax.random.PRNGKey(0)
    k1, k2, k3, k4 = jax.random.split(key, 4)

    B, C, H, W = 2, 4, 16, 16  # NCHW
    # pred: log-depth predictions (any real value)
    pred = jax.random.normal(k1, (B, C, H, W), dtype=jnp.float32)
    # gt: depth map with some values <= eps (masked out)
    gt = jax.random.uniform(k2, (B, C, H, W), dtype=jnp.float32,
                            minval=-0.2, maxval=5.0)

    loss = log_depth_l1_loss(pred, gt)
    jax.block_until_ready(loss)
    ref = _reference(pred, gt)
    assert jnp.allclose(loss, ref, rtol=1e-5, atol=1e-5), (loss, ref)

    # Exercise the multi-tile / ragged-edge / dual-shard path at a small size.
    pred2 = jax.random.normal(k3, (2, 4, 16, 24), dtype=jnp.float32)
    gt2 = jax.random.uniform(k4, (2, 4, 16, 24), dtype=jnp.float32,
                             minval=-0.2, maxval=5.0)
    loss2 = log_depth_l1_loss(pred2, gt2, tile_rows=16, num_parallel=2,
                              chunk_rows=8)
    jax.block_until_ready(loss2)
    ref2 = _reference(pred2, gt2)
    assert jnp.allclose(loss2, ref2, rtol=1e-5, atol=1e-5), (loss2, ref2)

    print("KERNEL_OK")
</pallas_src>

<mosaic_0001>
module attributes {stable_mosaic.version = 11 : i64} {
  func.func @_logdepth_l1_kernel(%arg0: i32, %arg1: i32, %arg2: memref<16x128xf32, #tpu.memory_space<vmem>>, %arg3: memref<16x128xf32, #tpu.memory_space<vmem>>, %arg4: memref<1x8x128xf32, #tpu.memory_space<vmem>>, %arg5: memref<1x8x128xf32, #tpu.memory_space<vmem>>) attributes {dimension_semantics = [#tpu.dimension_semantics<parallel>, #tpu.dimension_semantics<arbitrary>], iteration_bounds = array<i64: 1, 1>, scalar_prefetch = 0 : i64, scratch_operands = 0 : i64, tpu.core_type = #tpu.core_type<tc>, window_params = [{transform_indices = @transform_0, window_bounds = array<i64: 16, 128>}, {transform_indices = @transform_1, window_bounds = array<i64: 16, 128>}, {transform_indices = @transform_2, window_bounds = array<i64: 1, 8, 128>}, {transform_indices = @transform_3, window_bounds = array<i64: 1, 8, 128>}]} {
    %c0_i32 = arith.constant 0 : i32
    %0 = arith.cmpi eq, %arg1, %c0_i32 : i32
    %1 = arith.extui %0 : i1 to i32
    %c0_i32_0 = arith.constant 0 : i32
    %2 = arith.cmpi ne, %1, %c0_i32_0 : i32
    scf.if %2 {
      %cst_19 = arith.constant 0.000000e+00 : f32
      %37 = vector.broadcast %cst_19 : f32 to vector<1x8x128xf32>
      %c0_20 = arith.constant 0 : index
      %c0_21 = arith.constant 0 : index
      %c0_22 = arith.constant 0 : index
      %38 = vector.load %arg4[%c0_20, %c0_21, %c0_22] : memref<1x8x128xf32, #tpu.memory_space<vmem>>, vector<1x8x128xf32>
      tpu.vector_store %arg4[%c0_20, %c0_21, %c0_22], %37 {strides = array<i32>} : memref<1x8x128xf32, #tpu.memory_space<vmem>>, vector<1x8x128xf32>,
      %cst_23 = arith.constant 0.000000e+00 : f32
      %39 = vector.broadcast %cst_23 : f32 to vector<1x8x128xf32>
      %c0_24 = arith.constant 0 : index
      %c0_25 = arith.constant 0 : index
      %c0_26 = arith.constant 0 : index
      %40 = vector.load %arg5[%c0_24, %c0_25, %c0_26] : memref<1x8x128xf32, #tpu.memory_space<vmem>>, vector<1x8x128xf32>
      tpu.vector_store %arg5[%c0_24, %c0_25, %c0_26], %39 {strides = array<i32>} : memref<1x8x128xf32, #tpu.memory_space<vmem>>, vector<1x8x128xf32>,
    } else {
    }
    %cst = arith.constant 0.000000e+00 : f32
    %3 = vector.broadcast %cst : f32 to vector<8x128xf32>
    %c0_i32_1 = arith.constant 0 : i32
    %c16_i32 = arith.constant 16 : i32
    %4 = arith.muli %c0_i32_1, %c16_i32 : i32
    %5 = tpu.assume_multiple %4, 16 : i32
    %6 = arith.index_cast %5 : i32 to index
    %c0 = arith.constant 0 : index
    %7 = vector.load %arg2[%6, %c0] : memref<16x128xf32, #tpu.memory_space<vmem>>, vector<16x128xf32>
    %8 = arith.index_cast %5 : i32 to index
    %c0_2 = arith.constant 0 : index
    %9 = vector.load %arg3[%8, %c0_2] : memref<16x128xf32, #tpu.memory_space<vmem>>, vector<16x128xf32>
    %cst_3 = arith.constant 9.99999974E-6 : f32
    %10 = vector.broadcast %cst_3 : f32 to vector<16x128xf32>
    %11 = arith.cmpf ogt, %9, %10 : vector<16x128xf32>
    %12 = math.log %9 : vector<16x128xf32>
    %13 = arith.subf %12, %7 : vector<16x128xf32>
    %14 = math.absf %13 : vector<16x128xf32>
    %cst_4 = arith.constant 0.000000e+00 : f32
    %15 = vector.broadcast %cst_4 : f32 to vector<16x128xf32>
    %16 = arith.select %11, %14, %15 : vector<16x128xi1>, vector<16x128xf32>
    %17 = arith.extui %11 : vector<16x128xi1> to vector<16x128xi32>
    %18 = arith.sitofp %17 : vector<16x128xi32> to vector<16x128xf32>
    %19 = vector.shape_cast %16 : vector<16x128xf32> to vector<2x8x128xf32>
    %cst_5 = arith.constant dense<0.000000e+00> : vector<8x128xf32>
    %20 = vector.multi_reduction <add>, %19, %cst_5 [0] : vector<2x8x128xf32> to vector<8x128xf32>
    %21 = arith.addf %3, %20 : vector<8x128xf32>
    %22 = vector.shape_cast %18 : vector<16x128xf32> to vector<2x8x128xf32>
    %cst_6 = arith.constant dense<0.000000e+00> : vector<8x128xf32>
    %23 = vector.multi_reduction <add>, %22, %cst_6 [0] : vector<2x8x128xf32> to vector<8x128xf32>
    %24 = arith.addf %3, %23 : vector<8x128xf32>
    %c1_i32 = arith.constant 1 : i32
    %c0_7 = arith.constant 0 : index
    %c0_8 = arith.constant 0 : index
    %c0_9 = arith.constant 0 : index
    %25 = vector.load %arg4[%c0_7, %c0_8, %c0_9] : memref<1x8x128xf32, #tpu.memory_space<vmem>>, vector<1x8x128xf32>
    %26 = vector.shape_cast %25 : vector<1x8x128xf32> to vector<8x128xf32>
    %27 = arith.addf %26, %21 : vector<8x128xf32>
    %c0_10 = arith.constant 0 : index
    %c0_11 = arith.constant 0 : index
    %c0_12 = arith.constant 0 : index
    %28 = vector.load %arg4[%c0_10, %c0_11, %c0_12] : memref<1x8x128xf32, #tpu.memory_space<vmem>>, vector<1x8x128xf32>
    %29 = vector.shape_cast %28 : vector<1x8x128xf32> to vector<8x128xf32>
    %30 = vector.shape_cast %27 : vector<8x128xf32> to vector<1x8x128xf32>
    tpu.vector_store %arg4[%c0_10, %c0_11, %c0_12], %30 {strides = array<i32>} : memref<1x8x128xf32, #tpu.memory_space<vmem>>, vector<1x8x128xf32>,
    %c0_13 = arith.constant 0 : index
    %c0_14 = arith.constant 0 : index
    %c0_15 = arith.constant 0 : index
    %31 = vector.load %arg5[%c0_13, %c0_14, %c0_15] : memref<1x8x128xf32, #tpu.memory_space<vmem>>, vector<1x8x128xf32>
    %32 = vector.shape_cast %31 : vector<1x8x128xf32> to vector<8x128xf32>
    %33 = arith.addf %32, %24 : vector<8x128xf32>
    %c0_16 = arith.constant 0 : index
    %c0_17 = arith.constant 0 : index
    %c0_18 = arith.constant 0 : index
    %34 = vector.load %arg5[%c0_16, %c0_17, %c0_18] : memref<1x8x128xf32, #tpu.memory_space<vmem>>, vector<1x8x128xf32>
    %35 = vector.shape_cast %34 : vector<1x8x128xf32> to vector<8x128xf32>
    %36 = vector.shape_cast %33 : vector<8x128xf32> to vector<1x8x128xf32>
    tpu.vector_store %arg5[%c0_16, %c0_17, %c0_18], %36 {strides = array<i32>} : memref<1x8x128xf32, #tpu.memory_space<vmem>>, vector<1x8x128xf32>,
    return
  }
  func.func @transform_0(%arg0: i32, %arg1: i32) -> (i32, i32) {
    %c1_i32 = arith.constant 1 : i32
    %0 = arith.muli %arg0, %c1_i32 : i32
    %1 = arith.addi %0, %arg1 : i32
    %c0_i32 = arith.constant 0 : i32
    %2 = arith.minsi %1, %c0_i32 : i32
    %c0_i32_0 = arith.constant 0 : i32
    %c0_i32_1 = arith.constant 0 : i32
    return %2, %c0_i32_0 : i32, i32
  }
  func.func @transform_1(%arg0: i32, %arg1: i32) -> (i32, i32) {
    %c1_i32 = arith.constant 1 : i32
    %0 = arith.muli %arg0, %c1_i32 : i32
    %1 = arith.addi %0, %arg1 : i32
    %c0_i32 = arith.constant 0 : i32
    %2 = arith.minsi %1, %c0_i32 : i32
    %c0_i32_0 = arith.constant 0 : i32
    %c0_i32_1 = arith.constant 0 : i32
    return %2, %c0_i32_0 : i32, i32
  }
  func.func @transform_2(%arg0: i32, %arg1: i32) -> (i32, i32, i32) {
    %c0_i32 = arith.constant 0 : i32
    %c0_i32_0 = arith.constant 0 : i32
    %c0_i32_1 = arith.constant 0 : i32
    return %arg0, %c0_i32, %c0_i32_0 : i32, i32, i32
  }
  func.func @transform_3(%arg0: i32, %arg1: i32) -> (i32, i32, i32) {
    %c0_i32 = arith.constant 0 : i32
    %c0_i32_0 = arith.constant 0 : i32
    %c0_i32_1 = arith.constant 0 : i32
    return %arg0, %c0_i32, %c0_i32_0 : i32, i32, i32
  }
}

</mosaic_0001>

<llo_original>
// kernel: tpu_custom_call.1
$region0: #{tpu_custom_call.1}
  #allocation0 [shape = 'u32[]', space=smem, size = 0x4, offset = 0x4, fixed_abs, tag = 'smem constant byte address 0x4 - core index']
  #allocation1 [shape = 'u32[72,128]{1,0:T(1,128)}', space=vmem, size = 0x9000, scoped, tag = 'internal scratch']
  %s0 = inlined_call_operand.hbm [shape: f32[16,128], index: 0, kind: input, shape index: {}]
  %s1 = inlined_call_operand.hbm [shape: f32[16,128], index: 1, kind: input, shape index: {}]
  %s2 = inlined_call_operand.hbm [shape: f32[1,8,128], index: 2, kind: output, shape index: {0}]
  %s3 = inlined_call_operand.hbm [shape: f32[1,8,128], index: 3, kind: output, shape index: {1}]
  %4 = xla_tuple %s2, %s3
  %s5 = sld [smem:[#allocation0]]
  $region38: #{tpu_custom_call.1} parent=0
    _
  %s7 = ssub.s32 1, %s5
  %s8 = scalar_select 0, %s7, %s5
  $region1: #{tpu_custom_call.1} parent=0
    #allocation2 [shape = 'u8[8192]{0}', space=vmem, size = 0x2000, scoped, tag = 'input window, operand 0, single buffered']
    #allocation3 [shape = 's32[1]{0}', space=sflag, size = 0x4, scoped, tag = 'scoped memory for tpu_custom_call.1']
    #allocation4 [shape = 's32[1]{0}', space=sflag, size = 0x4, scoped, tag = 'scoped memory for tpu_custom_call.1']
    #allocation5 [shape = 'u8[8192]{0}', space=vmem, size = 0x2000, scoped, tag = 'input window, operand 1, single buffered']
    #allocation6 [shape = 's32[1]{0}', space=sflag, size = 0x4, scoped, tag = 'scoped memory for tpu_custom_call.1']
    #allocation7 [shape = 'u8[4096]{0}', space=vmem, size = 0x1000, scoped, tag = 'output window, operand 0, single buffered']
    #allocation8 [shape = 'u8[4096]{0}', space=vmem, size = 0x1000, scoped, tag = 'output window, operand 1, single buffered']
    #allocation9 [shape = 's32[1]{0}', space=sflag, size = 0x4, scoped, tag = 'scoped memory for tpu_custom_call.1']
    %9 = vsyncpa [#allocation3], 0
    %10 = vsyncpa [#allocation6], 0
    %11 = vsyncpa [#allocation4], 0
    %12 = vsyncpa [#allocation9], 0
    // Predicated region
    $region2: #{tpu_custom_call.1} parent=1 // pred_check
      _
    $region3: #{tpu_custom_call.1} parent=1 // pred_check_branch
      %14 = sbr.rel (0) target = $region5
    $region4: #{tpu_custom_call.1} parent=1 // pred_region
      %s15 = sadd.s32 0, 0
      %p16 = scmp.lt.s32.totalorder %s15, 0
      %s17 = scalar_select %p16, %s15, 0
      %s18 = smul.u32 2, %s17
      %20 = vsyncadd [#allocation3], 0
      %s21 = smul.addr %s18, 8
      %s22 = scalar_lea.hbm %s0, %s21
      %s23 = sshll.u32 %s22, 4
      %s24 = int_to_ptr.hbm [resolvable:$true] %s23
      %s25 = sshll.u32 [#allocation2], 4
      %s26 = int_to_ptr.vmem [resolvable:$true] %s25
      %31 = dma.hbm_to_vmem [thread:$0]  %s24, 256, %s26, [#allocation3], 128, 128, 8
    $region5: #{tpu_custom_call.1} parent=1 // pred_fallthru
      _
    // Predicated region
    $region6: #{tpu_custom_call.1} parent=1 // pred_check
      _
    $region7: #{tpu_custom_call.1} parent=1 // pred_check_branch
      %33 = sbr.rel (0) target = $region9
    $region8: #{tpu_custom_call.1} parent=1 // pred_region
      %s34 = sadd.s32 0, 0
      %p35 = scmp.lt.s32.totalorder %s34, 0
      %s36 = scalar_select %p35, %s34, 0
      %s37 = smul.u32 2, %s36
      %39 = vsyncadd [#allocation6], 0
      %s40 = smul.addr %s37, 8
      %s41 = scalar_lea.hbm %s1, %s40
      %s42 = sshll.u32 %s41, 4
      %s43 = int_to_ptr.hbm [resolvable:$true] %s42
      %s44 = sshll.u32 [#allocation5], 4
      %s45 = int_to_ptr.vmem [resolvable:$true] %s44
      %50 = dma.hbm_to_vmem [thread:$0]  %s43, 256, %s45, [#allocation6], 128, 128, 8
    $region9: #{tpu_custom_call.1} parent=1 // pred_fallthru
      _
    // Predicated region
    $region10: #{tpu_custom_call.1} parent=1 // pred_check
      _
    $region11: #{tpu_custom_call.1} parent=1 // pred_check_branch
      %52 = sbr.rel (0) target = $region13
    $region12: #{tpu_custom_call.1} parent=1 // pred_region
      %54 = dma.done [#allocation3], 256
    $region13: #{tpu_custom_call.1} parent=1 // pred_fallthru
      _
    // Predicated region
    $region14: #{tpu_custom_call.1} parent=1 // pred_check
      _
    $region15: #{tpu_custom_call.1} parent=1 // pred_check_branch
      %56 = sbr.rel (0) target = $region17
    $region16: #{tpu_custom_call.1} parent=1 // pred_region
      %58 = dma.done [#allocation6], 256
    $region17: #{tpu_custom_call.1} parent=1 // pred_fallthru
      _
    %s59 = sadd.s32 0, 0
    %p60 = scmp.lt.s32.totalorder %s59, 0
    %s61 = scalar_select %p60, %s59, 0
    %s62 = smul.u32 2, %s61
    %s63 = sadd.s32 0, 0
    %p64 = scmp.lt.s32.totalorder %s63, 0
    %s65 = scalar_select %p64, %s63, 0
    %s66 = smul.u32 2, %s65
    %p67 = scmp.eq.s32.totalorder 0, 0
    // Predicated region
    $region18: #{tpu_custom_call.1} parent=1 // pred_check
      %p68 = pneg %p67
    $region19: #{tpu_custom_call.1} parent=1 // pred_check_branch
      %70 = sbr.rel (%p68) target = $region21
    $region20: #{tpu_custom_call.1} parent=1 // pred_region
      %71 = vst [vmem:[#allocation7] sm:$0xff] 0.0
      %72 = vst [vmem:[#allocation8] sm:$0xff] 0.0
    $region21: #{tpu_custom_call.1} parent=1 // pred_fallthru
      _
    %v73 = vld [vmem:[#allocation2] sm:$0xff]
    %v74 = vld [vmem:[#allocation2 + $0x8] sm:$0xff]
    %v75 = vld [vmem:[#allocation5] sm:$0xff]
    %v76 = vld [vmem:[#allocation5 + $0x8] sm:$0xff]
    %vm77 = vcmp.gt.f32.partialorder %v75, 1e-05
    %vm78 = vcmp.gt.f32.partialorder %v76, 1e-05
    %v79 = vlog2.pop %v75
    %v80 = vmul.f32 %v79, 0.6931472
    %v81 = vlog2.pop %v76
    %v82 = vmul.f32 %v81, 0.6931472
    %v83 = vsub.f32 %v80, %v73
    %v84 = vsub.f32 %v82, %v74
    %v85 = vand.u32 2147483647, %v83
    %v86 = vand.u32 2147483647, %v84
    %v87 = vsel %vm77, %v85, 0.0
    %v88 = vsel %vm78, %v86, 0.0
    %v89 = vsel %vm77, 1, 0
    %v90 = vsel %vm78, 1, 0
    %v91 = vcvt.s32.f32 %v89
    %v92 = vcvt.s32.f32 %v90
    %v93 = vadd.f32 %v87, %v88
    %v94 = vadd.f32 %v93, 0.0
    %v95 = vadd.f32 %v91, %v92
    %v96 = vadd.f32 %v95, 0.0
    %v97 = vld [vmem:[#allocation7] sm:$0xff]
    %v98 = vadd.f32 %v97, %v94
    %99 = vst [vmem:[#allocation7] sm:$0xff] %v98
    %v100 = vld [vmem:[#allocation8] sm:$0xff]
    %v101 = vadd.f32 %v100, %v96
    %102 = vst [vmem:[#allocation8] sm:$0xff] %v101
    // Predicated region
    $region22: #{tpu_custom_call.1} parent=1 // pred_check
      _
    $region23: #{tpu_custom_call.1} parent=1 // pred_check_branch
      %104 = sbr.rel (0) target = $region25
    $region24: #{tpu_custom_call.1} parent=1 // pred_region
      %106 = vsyncadd [#allocation4], 0
      %s108 = sshll.u32 [#allocation7], 4
      %s109 = int_to_ptr.vmem [resolvable:$true] %s108
      %s110 = sshll.u32 %s2, 4
      %s111 = int_to_ptr.hbm [resolvable:$true] %s110
      %113 = dma.vmem_to_hbm [thread:$0]  %s109, 128, %s111, [#allocation4]
    $region25: #{tpu_custom_call.1} parent=1 // pred_fallthru
      _
    // Predicated region
    $region26: #{tpu_custom_call.1} parent=1 // pred_check
      _
    $region27: #{tpu_custom_call.1} parent=1 // pred_check_branch
      %115 = sbr.rel (0) target = $region29
    $region28: #{tpu_custom_call.1} parent=1 // pred_region
      %117 = vsyncadd [#allocation9], 0
      %s119 = sshll.u32 [#allocation8], 4
      %s120 = int_to_ptr.vmem [resolvable:$true] %s119
      %s121 = sshll.u32 %s3, 4
      %s122 = int_to_ptr.hbm [resolvable:$true] %s121
      %124 = dma.vmem_to_hbm [thread:$0]  %s120, 128, %s122, [#allocation9]
    $region29: #{tpu_custom_call.1} parent=1 // pred_fallthru
      _
    // Predicated region
    $region30: #{tpu_custom_call.1} parent=1 // pred_check
      _
    $region31: #{tpu_custom_call.1} parent=1 // pred_check_branch
      %126 = sbr.rel (0) target = $region33
    $region32: #{tpu_custom_call.1} parent=1 // pred_region
      %128 = dma.done [#allocation4], 128
    $region33: #{tpu_custom_call.1} parent=1 // pred_fallthru
      _
    // Predicated region
    $region34: #{tpu_custom_call.1} parent=1 // pred_check
      _
    $region35: #{tpu_custom_call.1} parent=1 // pred_check_branch
      %130 = sbr.rel (0) target = $region37
    $region36: #{tpu_custom_call.1} parent=1 // pred_region
      %132 = dma.done [#allocation9], 128
    $region37: #{tpu_custom_call.1} parent=1 // pred_fallthru
      _
    %133 = vsyncpa [#allocation3], 1
    %134 = vsyncpa [#allocation6], 1
    %135 = vsyncpa [#allocation4], 1
    %136 = vsyncpa [#allocation9], 1

</llo_original>
